<compile_context>
chip_gen: v6e
topology: v6e:2x2x1
jax: 0.10.0
libtpu: 0.0.40
codegen_flags: <defaults>
</compile_context>

<pallas_src>
import functools

import jax
import jax.numpy as jnp
from jax import lax
from jax.experimental import pallas as pl
from jax.experimental.pallas import tpu as pltpu

HIDDEN = 32
NUM_RESBLOCKS = 2
LAYERS_PER_BLOCK = 2
LN_EPS = 1e-5
LANE = 128


def _cdiv(a, b):
    return -(-a // b)


def _round_up(n, m):
    return _cdiv(n, m) * m


# ----------------------------- Pallas kernel -------------------------------


def _value_head_kernel(
    x_ref,       # (TN, H)      raw row-major block straight from the torso output
    packed_ref,  # (H, K)       packed LN gammas/betas, linear biases, out-LN, out bias
    rb_w_ref,    # (R, L, H, H) resblock linear weights, (out, in) = PyTorch layout
    ow_ref,      # (1, H)       output linear weight, (out=1, in=H) = PyTorch layout
    out_ref,     # (1, TN)
    *,
    num_resblocks: int,
    layers_per_block: int,
):
    R, L = num_resblocks, layers_per_block
    H = x_ref.shape[1]
    inv_h = 1.0 / H
    mm_dtype = rb_w_ref.dtype

    def pcol(idx):
        # One packed parameter column -> (H, 1); broadcasts across lanes.
        return packed_ref[:, idx:idx + 1]

    def layer_norm(x, gamma, beta):
        # One-pass stats: the two sublane reductions are independent and can be
        # issued together; biased variance, eps inside rsqrt (== nn.LayerNorm).
        s1 = jnp.sum(x, axis=0, keepdims=True)        # (1, TN)
        s2 = jnp.sum(x * x, axis=0, keepdims=True)    # (1, TN)
        mu = s1 * inv_h
        var = s2 * inv_h - mu * mu
        inv = lax.rsqrt(var + LN_EPS)
        return (x - mu) * inv * gamma + beta

    # Lane-dense compute layout: hidden on sublanes, batch rows on lanes.
    # 32-bit in-kernel transpose (XLU has slack; no wrapper HBM round-trip).
    x = jnp.transpose(x_ref[...].astype(jnp.float32))     # (H, TN)

    # Resblock stack (statically unrolled; R and L are compile-time constants).
    for r in range(R):
        shortcut = x
        for l in range(L):
            idx = r * L + l
            gamma = pcol(idx)                   # (H, 1)
            beta = pcol(R * L + idx)            # (H, 1)
            bias = pcol(2 * R * L + idx)        # (H, 1)
            w = rb_w_ref[r, l]                  # (H_out, H_in), mm_dtype
            x = layer_norm(x, gamma, beta)
            x = jnp.maximum(x, 0.0)
            # y[out, n] = sum_in W[out, in] * x[in, n]  (== PyTorch x @ W.T, transposed)
            x = jnp.dot(w, x.astype(mm_dtype),
                        preferred_element_type=jnp.float32) + bias
        x = x + shortcut

    # Output MLP([hidden, 1]): LayerNorm -> ReLU -> Linear(H, 1)
    og = pcol(3 * R * L)
    ob = pcol(3 * R * L + 1)
    obias = packed_ref[0:1, 3 * R * L + 2:3 * R * L + 3]   # (1, 1) scalar output bias
    x = layer_norm(x, og, ob)
    x = jnp.maximum(x, 0.0)
    out = jnp.dot(ow_ref[...], x.astype(mm_dtype),
                  preferred_element_type=jnp.float32) + obias   # (1, TN)
    out_ref[...] = out.astype(out_ref.dtype)


# ------------------------- param packing & wrapper --------------------------


def pack_params(pt_params, mm_dtype=jnp.bfloat16):
    """PyTorch-layout params -> (packed_slab, rb_w, ow) kernel inputs."""
    rb_gamma, rb_beta, rb_w, rb_bias, og, ob, ow, obias = pt_params
    r, l, h = rb_gamma.shape
    cols = [rb_gamma[ri, li] for ri in range(r) for li in range(l)]
    cols += [rb_beta[ri, li] for ri in range(r) for li in range(l)]
    cols += [rb_bias[ri, li] for ri in range(r) for li in range(l)]
    cols += [og, ob, jnp.full((h,), obias, jnp.float32)]
    packed = jnp.stack(cols, axis=1).astype(jnp.float32)   # (H, 3*R*L + 3)
    return packed, rb_w.astype(mm_dtype), ow.astype(mm_dtype)


def _choose_tile(n, col_tile):
    """Lane-aligned row tile: big, low padding waste, >=2 grid steps when possible."""
    n128 = _round_up(max(n, 1), LANE)
    tile_cap = max(LANE, min(col_tile, n128))
    if n128 >= 2 * LANE:
        # v7x has 2 TensorCores sharded over the parallel grid axis; keep >=2 steps.
        tile_cap = min(tile_cap, _round_up(_cdiv(n128, 2), LANE))
    steps = _cdiv(n128, tile_cap)
    return _round_up(_cdiv(n128, steps), LANE)


def value_head(x, pt_params, *, col_tile=4096, mm_dtype=jnp.bfloat16):
    """x: (N, H) float32/bf16.  Returns (N, 1) float32."""
    # TODO(synk): at tiny N (e.g. batch*seq=16) this head should be fused into the
    # upstream torso kernel; a standalone pallas_call only pays off for large N.
    n, h = x.shape
    packed, rb_w, ow = pack_params(pt_params, mm_dtype)
    r, l = rb_w.shape[0], rb_w.shape[1]
    k = packed.shape[1]

    tile = _choose_tile(n, col_tile)
    grid = _cdiv(n, tile)      # partial last block: OOB reads are garbage lanes
                               # (discarded), OOB output stores are masked.

    cost = pl.CostEstimate(
        flops=int(n * (2 * r * l * h * h + 2 * h + 8 * h * (r * l + 1))),
        transcendentals=int(n * (r * l + 1)),
        bytes_accessed=int(x.size * x.dtype.itemsize + n * 4
                           + packed.size * 4
                           + rb_w.size * rb_w.dtype.itemsize
                           + ow.size * ow.dtype.itemsize),
    )

    kernel = functools.partial(
        _value_head_kernel, num_resblocks=r, layers_per_block=l)

    out = pl.pallas_call(
        kernel,
        out_shape=jax.ShapeDtypeStruct((1, n), jnp.float32),
        grid=(grid,),
        in_specs=[
            pl.BlockSpec((tile, h), lambda i: (i, 0)),       # rows of x, no wrapper copy
            pl.BlockSpec((h, k), lambda i: (0, 0)),          # packed small params
            pl.BlockSpec((r, l, h, h), lambda i: (0, 0, 0, 0)),
            pl.BlockSpec((1, h), lambda i: (0, 0)),
        ],
        out_specs=pl.BlockSpec((1, tile), lambda i: (0, i)),  # lane-dense output
        compiler_params=pltpu.CompilerParams(
            dimension_semantics=("parallel",),
        ),
        cost_estimate=cost,
    )(x, packed, rb_w, ow)

    return out.reshape(n, 1)                                 # (N, 1)


# ------------------------- parameter init & reference ----------------------


def init_params(key, hidden=HIDDEN, num_resblocks=NUM_RESBLOCKS, layers=LAYERS_PER_BLOCK):
    """Parameters in the PyTorch layout: Linear weights are (out, in)."""
    ks = jax.random.split(key, 4)
    rb_gamma = jnp.ones((num_resblocks, layers, hidden), jnp.float32)
    rb_beta = jnp.zeros((num_resblocks, layers, hidden), jnp.float32)
    rb_w = 0.05 * jax.random.normal(ks[0], (num_resblocks, layers, hidden, hidden), jnp.float32)
    rb_bias = 0.01 * jax.random.normal(ks[1], (num_resblocks, layers, hidden), jnp.float32)
    og = jnp.ones((hidden,), jnp.float32)
    ob = jnp.zeros((hidden,), jnp.float32)
    ow = 0.05 * jax.random.normal(ks[2], (1, hidden), jnp.float32)
    obias = 0.01 * jax.random.normal(ks[3], (), jnp.float32)
    return (rb_gamma, rb_beta, rb_w, rb_bias, og, ob, ow, obias)


def value_head_ref(x, pt_params):
    rb_gamma, rb_beta, rb_w, rb_bias, og, ob, ow, obias = pt_params

    def ln(x, g, b):
        mu = jnp.mean(x, axis=-1, keepdims=True)
        var = jnp.mean(jnp.square(x - mu), axis=-1, keepdims=True)
        return (x - mu) * lax.rsqrt(var + LN_EPS) * g + b

    r, l = rb_w.shape[0], rb_w.shape[1]
    for ri in range(r):
        shortcut = x
        for li in range(l):
            x = ln(x, rb_gamma[ri, li], rb_beta[ri, li])
            x = jnp.maximum(x, 0.0)
            x = x @ rb_w[ri, li].T + rb_bias[ri, li]
        x = x + shortcut
    x = ln(x, og, ob)
    x = jnp.maximum(x, 0.0)
    return x @ ow.T + obias


# --------------------------------- main -------------------------------------

if __name__ == "__main__":
    key = jax.random.PRNGKey(0)
    k_x, k_p = jax.random.split(key)

    batch, seq, hidden = 2, 8, HIDDEN
    x = jax.random.normal(k_x, (batch, seq, hidden), jnp.float32)
    pt_params = init_params(k_p)

    x_flat = x.reshape(batch * seq, hidden)     # glue reshape in plain JAX
    ref_flat = value_head_ref(x_flat, pt_params)

    # Exact-semantics path: f32 MXU operands must match the reference tightly.
    out_f32 = value_head(x_flat, pt_params, mm_dtype=jnp.float32)
    jax.block_until_ready(out_f32)
    assert jnp.allclose(out_f32, ref_flat, atol=1e-4, rtol=1e-4), "f32 mismatch vs reference"

    # Default fast path: bf16 MXU operands, f32 accumulation (looser tolerance).
    out_flat = value_head(x_flat, pt_params)
    jax.block_until_ready(out_flat)
    assert jnp.allclose(out_flat, ref_flat, atol=2e-2, rtol=2e-2), "bf16 mismatch vs reference"

    out = out_flat.reshape(batch, seq, 1)
    jax.block_until_ready(out)

    print("KERNEL_OK")
</pallas_src>

<mosaic_0001>
module attributes {stable_mosaic.version = 11 : i64} {
  func.func @_value_head_kernel(%arg0: i32, %arg1: memref<128x32xf32, #tpu.memory_space<vmem>>, %arg2: memref<32x15xf32, #tpu.memory_space<vmem>>, %arg3: memref<2x2x32x32xf32, #tpu.memory_space<vmem>>, %arg4: memref<1x32xf32, #tpu.memory_space<vmem>>, %arg5: memref<1x128xf32, #tpu.memory_space<vmem>>) attributes {dimension_semantics = [#tpu.dimension_semantics<parallel>], iteration_bounds = array<i64: 1>, scalar_prefetch = 0 : i64, scratch_operands = 0 : i64, tpu.core_type = #tpu.core_type<tc>, window_params = [{transform_indices = @transform_0, window_bounds = array<i64: 128, 32>}, {pipeline_mode = #tpu.pipeline_mode<synchronous>, transform_indices = @transform_1, window_bounds = array<i64: 32, 15>}, {pipeline_mode = #tpu.pipeline_mode<synchronous>, transform_indices = @transform_2, window_bounds = array<i64: 2, 2, 32, 32>}, {pipeline_mode = #tpu.pipeline_mode<synchronous>, transform_indices = @transform_3, window_bounds = array<i64: 1, 32>}, {transform_indices = @transform_4, window_bounds = array<i64: 1, 128>}]} {
    %c0 = arith.constant 0 : index
    %c0_0 = arith.constant 0 : index
    %0 = vector.load %arg1[%c0, %c0_0] : memref<128x32xf32, #tpu.memory_space<vmem>>, vector<128x32xf32>
    %1 = tpu.transpose %0, [1, 0] : vector<128x32xf32> -> vector<32x128xf32>
    %c0_1 = arith.constant 0 : index
    %c0_2 = arith.constant 0 : index
    %2 = vector.load %arg2[%c0_1, %c0_2] : memref<32x15xf32, #tpu.memory_space<vmem>>, vector<32x1xf32>
    %c0_3 = arith.constant 0 : index
    %c4 = arith.constant 4 : index
    %3 = vector.load %arg2[%c0_3, %c4] : memref<32x15xf32, #tpu.memory_space<vmem>>, vector<32x1xf32>
    %c0_4 = arith.constant 0 : index
    %c8 = arith.constant 8 : index
    %4 = vector.load %arg2[%c0_4, %c8] : memref<32x15xf32, #tpu.memory_space<vmem>>, vector<32x1xf32>
    %c0_5 = arith.constant 0 : index
    %c0_6 = arith.constant 0 : index
    %c0_7 = arith.constant 0 : index
    %c0_8 = arith.constant 0 : index
    %5 = vector.load %arg3[%c0_5, %c0_6, %c0_7, %c0_8] : memref<2x2x32x32xf32, #tpu.memory_space<vmem>>, vector<1x1x32x32xf32>
    %6 = vector.shape_cast %5 : vector<1x1x32x32xf32> to vector<32x32xf32>
    %cst = arith.constant dense<0.000000e+00> : vector<128xf32>
    %7 = vector.multi_reduction <add>, %1, %cst [0] : vector<32x128xf32> to vector<128xf32>
    %8 = vector.shape_cast %7 : vector<128xf32> to vector<1x128xf32>
    %9 = arith.mulf %1, %1 : vector<32x128xf32>
    %cst_9 = arith.constant dense<0.000000e+00> : vector<128xf32>
    %10 = vector.multi_reduction <add>, %9, %cst_9 [0] : vector<32x128xf32> to vector<128xf32>
    %11 = vector.shape_cast %10 : vector<128xf32> to vector<1x128xf32>
    %cst_10 = arith.constant 3.125000e-02 : f32
    %12 = vector.broadcast %cst_10 : f32 to vector<1x128xf32>
    %13 = arith.mulf %8, %12 : vector<1x128xf32>
    %cst_11 = arith.constant 3.125000e-02 : f32
    %14 = vector.broadcast %cst_11 : f32 to vector<1x128xf32>
    %15 = arith.mulf %11, %14 : vector<1x128xf32>
    %16 = arith.mulf %13, %13 : vector<1x128xf32>
    %17 = arith.subf %15, %16 : vector<1x128xf32>
    %cst_12 = arith.constant 9.99999974E-6 : f32
    %18 = vector.broadcast %cst_12 : f32 to vector<1x128xf32>
    %19 = arith.addf %17, %18 : vector<1x128xf32>
    %20 = math.rsqrt %19 : vector<1x128xf32>
    %21 = vector.broadcast %13 : vector<1x128xf32> to vector<32x128xf32>
    %22 = arith.subf %1, %21 : vector<32x128xf32>
    %23 = vector.broadcast %20 : vector<1x128xf32> to vector<32x128xf32>
    %24 = arith.mulf %22, %23 : vector<32x128xf32>
    %25 = vector.broadcast %2 : vector<32x1xf32> to vector<32x128xf32>
    %26 = arith.mulf %24, %25 : vector<32x128xf32>
    %27 = vector.broadcast %3 : vector<32x1xf32> to vector<32x128xf32>
    %28 = arith.addf %26, %27 : vector<32x128xf32>
    %cst_13 = arith.constant 0.000000e+00 : f32
    %29 = vector.broadcast %cst_13 : f32 to vector<32x128xf32>
    %30 = arith.maximumf %28, %29 : vector<32x128xf32>
    %cst_14 = arith.constant dense<0.000000e+00> : vector<32x128xf32>
    %31 = tpu.matmul %6, %30, %cst_14 {dimension_numbers = #tpu.dot_dimension_numbers<[1], [0], [0], [1], [0, 0, 1, 1], [], []>} : vector<32x32xf32>, vector<32x128xf32>, vector<32x128xf32> -> vector<32x128xf32>
    %32 = vector.broadcast %4 : vector<32x1xf32> to vector<32x128xf32>
    %33 = arith.addf %31, %32 : vector<32x128xf32>
    %c0_15 = arith.constant 0 : index
    %c1 = arith.constant 1 : index
    %34 = vector.load %arg2[%c0_15, %c1] : memref<32x15xf32, #tpu.memory_space<vmem>>, vector<32x1xf32>
    %c0_16 = arith.constant 0 : index
    %c5 = arith.constant 5 : index
    %35 = vector.load %arg2[%c0_16, %c5] : memref<32x15xf32, #tpu.memory_space<vmem>>, vector<32x1xf32>
    %c0_17 = arith.constant 0 : index
    %c9 = arith.constant 9 : index
    %36 = vector.load %arg2[%c0_17, %c9] : memref<32x15xf32, #tpu.memory_space<vmem>>, vector<32x1xf32>
    %c0_18 = arith.constant 0 : index
    %c1_19 = arith.constant 1 : index
    %c0_20 = arith.constant 0 : index
    %c0_21 = arith.constant 0 : index
    %37 = vector.load %arg3[%c0_18, %c1_19, %c0_20, %c0_21] : memref<2x2x32x32xf32, #tpu.memory_space<vmem>>, vector<1x1x32x32xf32>
    %38 = vector.shape_cast %37 : vector<1x1x32x32xf32> to vector<32x32xf32>
    %cst_22 = arith.constant dense<0.000000e+00> : vector<128xf32>
    %39 = vector.multi_reduction <add>, %33, %cst_22 [0] : vector<32x128xf32> to vector<128xf32>
    %40 = vector.shape_cast %39 : vector<128xf32> to vector<1x128xf32>
    %41 = arith.mulf %33, %33 : vector<32x128xf32>
    %cst_23 = arith.constant dense<0.000000e+00> : vector<128xf32>
    %42 = vector.multi_reduction <add>, %41, %cst_23 [0] : vector<32x128xf32> to vector<128xf32>
    %43 = vector.shape_cast %42 : vector<128xf32> to vector<1x128xf32>
    %cst_24 = arith.constant 3.125000e-02 : f32
    %44 = vector.broadcast %cst_24 : f32 to vector<1x128xf32>
    %45 = arith.mulf %40, %44 : vector<1x128xf32>
    %cst_25 = arith.constant 3.125000e-02 : f32
    %46 = vector.broadcast %cst_25 : f32 to vector<1x128xf32>
    %47 = arith.mulf %43, %46 : vector<1x128xf32>
    %48 = arith.mulf %45, %45 : vector<1x128xf32>
    %49 = arith.subf %47, %48 : vector<1x128xf32>
    %cst_26 = arith.constant 9.99999974E-6 : f32
    %50 = vector.broadcast %cst_26 : f32 to vector<1x128xf32>
    %51 = arith.addf %49, %50 : vector<1x128xf32>
    %52 = math.rsqrt %51 : vector<1x128xf32>
    %53 = vector.broadcast %45 : vector<1x128xf32> to vector<32x128xf32>
    %54 = arith.subf %33, %53 : vector<32x128xf32>
    %55 = vector.broadcast %52 : vector<1x128xf32> to vector<32x128xf32>
    %56 = arith.mulf %54, %55 : vector<32x128xf32>
    %57 = vector.broadcast %34 : vector<32x1xf32> to vector<32x128xf32>
    %58 = arith.mulf %56, %57 : vector<32x128xf32>
    %59 = vector.broadcast %35 : vector<32x1xf32> to vector<32x128xf32>
    %60 = arith.addf %58, %59 : vector<32x128xf32>
    %cst_27 = arith.constant 0.000000e+00 : f32
    %61 = vector.broadcast %cst_27 : f32 to vector<32x128xf32>
    %62 = arith.maximumf %60, %61 : vector<32x128xf32>
    %cst_28 = arith.constant dense<0.000000e+00> : vector<32x128xf32>
    %63 = tpu.matmul %38, %62, %cst_28 {dimension_numbers = #tpu.dot_dimension_numbers<[1], [0], [0], [1], [0, 0, 1, 1], [], []>} : vector<32x32xf32>, vector<32x128xf32>, vector<32x128xf32> -> vector<32x128xf32>
    %64 = vector.broadcast %36 : vector<32x1xf32> to vector<32x128xf32>
    %65 = arith.addf %63, %64 : vector<32x128xf32>
    %66 = arith.addf %65, %1 : vector<32x128xf32>
    %c0_29 = arith.constant 0 : index
    %c2 = arith.constant 2 : index
    %67 = vector.load %arg2[%c0_29, %c2] : memref<32x15xf32, #tpu.memory_space<vmem>>, vector<32x1xf32>
    %c0_30 = arith.constant 0 : index
    %c6 = arith.constant 6 : index
    %68 = vector.load %arg2[%c0_30, %c6] : memref<32x15xf32, #tpu.memory_space<vmem>>, vector<32x1xf32>
    %c0_31 = arith.constant 0 : index
    %c10 = arith.constant 10 : index
    %69 = vector.load %arg2[%c0_31, %c10] : memref<32x15xf32, #tpu.memory_space<vmem>>, vector<32x1xf32>
    %c1_32 = arith.constant 1 : index
    %c0_33 = arith.constant 0 : index
    %c0_34 = arith.constant 0 : index
    %c0_35 = arith.constant 0 : index
    %70 = vector.load %arg3[%c1_32, %c0_33, %c0_34, %c0_35] : memref<2x2x32x32xf32, #tpu.memory_space<vmem>>, vector<1x1x32x32xf32>
    %71 = vector.shape_cast %70 : vector<1x1x32x32xf32> to vector<32x32xf32>
    %cst_36 = arith.constant dense<0.000000e+00> : vector<128xf32>
    %72 = vector.multi_reduction <add>, %66, %cst_36 [0] : vector<32x128xf32> to vector<128xf32>
    %73 = vector.shape_cast %72 : vector<128xf32> to vector<1x128xf32>
    %74 = arith.mulf %66, %66 : vector<32x128xf32>
    %cst_37 = arith.constant dense<0.000000e+00> : vector<128xf32>
    %75 = vector.multi_reduction <add>, %74, %cst_37 [0] : vector<32x128xf32> to vector<128xf32>
    %76 = vector.shape_cast %75 : vector<128xf32> to vector<1x128xf32>
    %cst_38 = arith.constant 3.125000e-02 : f32
    %77 = vector.broadcast %cst_38 : f32 to vector<1x128xf32>
    %78 = arith.mulf %73, %77 : vector<1x128xf32>
    %cst_39 = arith.constant 3.125000e-02 : f32
    %79 = vector.broadcast %cst_39 : f32 to vector<1x128xf32>
    %80 = arith.mulf %76, %79 : vector<1x128xf32>
    %81 = arith.mulf %78, %78 : vector<1x128xf32>
    %82 = arith.subf %80, %81 : vector<1x128xf32>
    %cst_40 = arith.constant 9.99999974E-6 : f32
    %83 = vector.broadcast %cst_40 : f32 to vector<1x128xf32>
    %84 = arith.addf %82, %83 : vector<1x128xf32>
    %85 = math.rsqrt %84 : vector<1x128xf32>
    %86 = vector.broadcast %78 : vector<1x128xf32> to vector<32x128xf32>
    %87 = arith.subf %66, %86 : vector<32x128xf32>
    %88 = vector.broadcast %85 : vector<1x128xf32> to vector<32x128xf32>
    %89 = arith.mulf %87, %88 : vector<32x128xf32>
    %90 = vector.broadcast %67 : vector<32x1xf32> to vector<32x128xf32>
    %91 = arith.mulf %89, %90 : vector<32x128xf32>
    %92 = vector.broadcast %68 : vector<32x1xf32> to vector<32x128xf32>
    %93 = arith.addf %91, %92 : vector<32x128xf32>
    %cst_41 = arith.constant 0.000000e+00 : f32
    %94 = vector.broadcast %cst_41 : f32 to vector<32x128xf32>
    %95 = arith.maximumf %93, %94 : vector<32x128xf32>
    %cst_42 = arith.constant dense<0.000000e+00> : vector<32x128xf32>
    %96 = tpu.matmul %71, %95, %cst_42 {dimension_numbers = #tpu.dot_dimension_numbers<[1], [0], [0], [1], [0, 0, 1, 1], [], []>} : vector<32x32xf32>, vector<32x128xf32>, vector<32x128xf32> -> vector<32x128xf32>
    %97 = vector.broadcast %69 : vector<32x1xf32> to vector<32x128xf32>
    %98 = arith.addf %96, %97 : vector<32x128xf32>
    %c0_43 = arith.constant 0 : index
    %c3 = arith.constant 3 : index
    %99 = vector.load %arg2[%c0_43, %c3] : memref<32x15xf32, #tpu.memory_space<vmem>>, vector<32x1xf32>
    %c0_44 = arith.constant 0 : index
    %c7 = arith.constant 7 : index
    %100 = vector.load %arg2[%c0_44, %c7] : memref<32x15xf32, #tpu.memory_space<vmem>>, vector<32x1xf32>
    %c0_45 = arith.constant 0 : index
    %c11 = arith.constant 11 : index
    %101 = vector.load %arg2[%c0_45, %c11] : memref<32x15xf32, #tpu.memory_space<vmem>>, vector<32x1xf32>
    %c1_46 = arith.constant 1 : index
    %c1_47 = arith.constant 1 : index
    %c0_48 = arith.constant 0 : index
    %c0_49 = arith.constant 0 : index
    %102 = vector.load %arg3[%c1_46, %c1_47, %c0_48, %c0_49] : memref<2x2x32x32xf32, #tpu.memory_space<vmem>>, vector<1x1x32x32xf32>
    %103 = vector.shape_cast %102 : vector<1x1x32x32xf32> to vector<32x32xf32>
    %cst_50 = arith.constant dense<0.000000e+00> : vector<128xf32>
    %104 = vector.multi_reduction <add>, %98, %cst_50 [0] : vector<32x128xf32> to vector<128xf32>
    %105 = vector.shape_cast %104 : vector<128xf32> to vector<1x128xf32>
    %106 = arith.mulf %98, %98 : vector<32x128xf32>
    %cst_51 = arith.constant dense<0.000000e+00> : vector<128xf32>
    %107 = vector.multi_reduction <add>, %106, %cst_51 [0] : vector<32x128xf32> to vector<128xf32>
    %108 = vector.shape_cast %107 : vector<128xf32> to vector<1x128xf32>
    %cst_52 = arith.constant 3.125000e-02 : f32
    %109 = vector.broadcast %cst_52 : f32 to vector<1x128xf32>
    %110 = arith.mulf %105, %109 : vector<1x128xf32>
    %cst_53 = arith.constant 3.125000e-02 : f32
    %111 = vector.broadcast %cst_53 : f32 to vector<1x128xf32>
    %112 = arith.mulf %108, %111 : vector<1x128xf32>
    %113 = arith.mulf %110, %110 : vector<1x128xf32>
    %114 = arith.subf %112, %113 : vector<1x128xf32>
    %cst_54 = arith.constant 9.99999974E-6 : f32
    %115 = vector.broadcast %cst_54 : f32 to vector<1x128xf32>
    %116 = arith.addf %114, %115 : vector<1x128xf32>
    %117 = math.rsqrt %116 : vector<1x128xf32>
    %118 = vector.broadcast %110 : vector<1x128xf32> to vector<32x128xf32>
    %119 = arith.subf %98, %118 : vector<32x128xf32>
    %120 = vector.broadcast %117 : vector<1x128xf32> to vector<32x128xf32>
    %121 = arith.mulf %119, %120 : vector<32x128xf32>
    %122 = vector.broadcast %99 : vector<32x1xf32> to vector<32x128xf32>
    %123 = arith.mulf %121, %122 : vector<32x128xf32>
    %124 = vector.broadcast %100 : vector<32x1xf32> to vector<32x128xf32>
    %125 = arith.addf %123, %124 : vector<32x128xf32>
    %cst_55 = arith.constant 0.000000e+00 : f32
    %126 = vector.broadcast %cst_55 : f32 to vector<32x128xf32>
    %127 = arith.maximumf %125, %126 : vector<32x128xf32>
    %cst_56 = arith.constant dense<0.000000e+00> : vector<32x128xf32>
    %128 = tpu.matmul %103, %127, %cst_56 {dimension_numbers = #tpu.dot_dimension_numbers<[1], [0], [0], [1], [0, 0, 1, 1], [], []>} : vector<32x32xf32>, vector<32x128xf32>, vector<32x128xf32> -> vector<32x128xf32>
    %129 = vector.broadcast %101 : vector<32x1xf32> to vector<32x128xf32>
    %130 = arith.addf %128, %129 : vector<32x128xf32>
    %131 = arith.addf %130, %66 : vector<32x128xf32>
    %c0_57 = arith.constant 0 : index
    %c12 = arith.constant 12 : index
    %132 = vector.load %arg2[%c0_57, %c12] : memref<32x15xf32, #tpu.memory_space<vmem>>, vector<32x1xf32>
    %c0_58 = arith.constant 0 : index
    %c13 = arith.constant 13 : index
    %133 = vector.load %arg2[%c0_58, %c13] : memref<32x15xf32, #tpu.memory_space<vmem>>, vector<32x1xf32>
    %c0_59 = arith.constant 0 : index
    %c14 = arith.constant 14 : index
    %134 = vector.load %arg2[%c0_59, %c14] : memref<32x15xf32, #tpu.memory_space<vmem>>, vector<1x1xf32>
    %cst_60 = arith.constant dense<0.000000e+00> : vector<128xf32>
    %135 = vector.multi_reduction <add>, %131, %cst_60 [0] : vector<32x128xf32> to vector<128xf32>
    %136 = vector.shape_cast %135 : vector<128xf32> to vector<1x128xf32>
    %137 = arith.mulf %131, %131 : vector<32x128xf32>
    %cst_61 = arith.constant dense<0.000000e+00> : vector<128xf32>
    %138 = vector.multi_reduction <add>, %137, %cst_61 [0] : vector<32x128xf32> to vector<128xf32>
    %139 = vector.shape_cast %138 : vector<128xf32> to vector<1x128xf32>
    %cst_62 = arith.constant 3.125000e-02 : f32
    %140 = vector.broadcast %cst_62 : f32 to vector<1x128xf32>
    %141 = arith.mulf %136, %140 : vector<1x128xf32>
    %cst_63 = arith.constant 3.125000e-02 : f32
    %142 = vector.broadcast %cst_63 : f32 to vector<1x128xf32>
    %143 = arith.mulf %139, %142 : vector<1x128xf32>
    %144 = arith.mulf %141, %141 : vector<1x128xf32>
    %145 = arith.subf %143, %144 : vector<1x128xf32>
    %cst_64 = arith.constant 9.99999974E-6 : f32
    %146 = vector.broadcast %cst_64 : f32 to vector<1x128xf32>
    %147 = arith.addf %145, %146 : vector<1x128xf32>
    %148 = math.rsqrt %147 : vector<1x128xf32>
    %149 = vector.broadcast %141 : vector<1x128xf32> to vector<32x128xf32>
    %150 = arith.subf %131, %149 : vector<32x128xf32>
    %151 = vector.broadcast %148 : vector<1x128xf32> to vector<32x128xf32>
    %152 = arith.mulf %150, %151 : vector<32x128xf32>
    %153 = vector.broadcast %132 : vector<32x1xf32> to vector<32x128xf32>
    %154 = arith.mulf %152, %153 : vector<32x128xf32>
    %155 = vector.broadcast %133 : vector<32x1xf32> to vector<32x128xf32>
    %156 = arith.addf %154, %155 : vector<32x128xf32>
    %cst_65 = arith.constant 0.000000e+00 : f32
    %157 = vector.broadcast %cst_65 : f32 to vector<32x128xf32>
    %158 = arith.maximumf %156, %157 : vector<32x128xf32>
    %c0_66 = arith.constant 0 : index
    %c0_67 = arith.constant 0 : index
    %159 = vector.load %arg4[%c0_66, %c0_67] : memref<1x32xf32, #tpu.memory_space<vmem>>, vector<1x32xf32>
    %cst_68 = arith.constant dense<0.000000e+00> : vector<1x128xf32>
    %160 = tpu.matmul %159, %158, %cst_68 {dimension_numbers = #tpu.dot_dimension_numbers<[1], [0], [0], [1], [0, 0, 1, 1], [], []>} : vector<1x32xf32>, vector<32x128xf32>, vector<1x128xf32> -> vector<1x128xf32>
    %161 = vector.broadcast %134 : vector<1x1xf32> to vector<1x128xf32>
    %162 = arith.addf %160, %161 : vector<1x128xf32>
    %c0_69 = arith.constant 0 : index
    %c0_70 = arith.constant 0 : index
    %163 = vector.load %arg5[%c0_69, %c0_70] : memref<1x128xf32, #tpu.memory_space<vmem>>, vector<1x128xf32>
    tpu.vector_store %arg5[%c0_69, %c0_70], %162 {strides = array<i32>} : memref<1x128xf32, #tpu.memory_space<vmem>>, vector<1x128xf32>,
    return
  }
  func.func @transform_0(%arg0: i32) -> (i32, i32) {
    %c0_i32 = arith.constant 0 : i32
    %c0_i32_0 = arith.constant 0 : i32
    return %arg0, %c0_i32 : i32, i32
  }
  func.func @transform_1(%arg0: i32) -> (i32, i32) {
    %c0_i32 = arith.constant 0 : i32
    %c0_i32_0 = arith.constant 0 : i32
    %c0_i32_1 = arith.constant 0 : i32
    return %c0_i32, %c0_i32_0 : i32, i32
  }
  func.func @transform_2(%arg0: i32) -> (i32, i32, i32, i32) {
    %c0_i32 = arith.constant 0 : i32
    %c0_i32_0 = arith.constant 0 : i32
    %c0_i32_1 = arith.constant 0 : i32
    %c0_i32_2 = arith.constant 0 : i32
    %c0_i32_3 = arith.constant 0 : i32
    return %c0_i32, %c0_i32_0, %c0_i32_1, %c0_i32_2 : i32, i32, i32, i32
  }
  func.func @transform_3(%arg0: i32) -> (i32, i32) {
    %c0_i32 = arith.constant 0 : i32
    %c0_i32_0 = arith.constant 0 : i32
    %c0_i32_1 = arith.constant 0 : i32
    return %c0_i32, %c0_i32_0 : i32, i32
  }
  func.func @transform_4(%arg0: i32) -> (i32, i32) {
    %c0_i32 = arith.constant 0 : i32
    %c0_i32_0 = arith.constant 0 : i32
    return %c0_i32, %arg0 : i32, i32
  }
}

</mosaic_0001>

<llo_original>
// kernel: tpu_custom_call.1
$region0: #{tpu_custom_call.1}
  #allocation0 [shape = 'u32[]', space=smem, size = 0x4, offset = 0x4, fixed_abs, tag = 'smem constant byte address 0x4 - core index']
  #allocation1 [shape = 'u32[144,128]{1,0:T(1,128)}', space=vmem, size = 0x12000, scoped, tag = 'internal scratch']
  %s0 = inlined_call_operand.vmem [shape: f32[16,32], index: 0, kind: input, shape index: {}]
  %s1 = inlined_call_operand.vmem [shape: f32[32,15], index: 1, kind: input, shape index: {}]
  %s2 = inlined_call_operand.hbm [shape: f32[2,2,32,32], index: 2, kind: input, shape index: {}]
  %s3 = inlined_call_operand.vmem [shape: f32[1,32], index: 3, kind: input, shape index: {}]
  %s4 = inlined_call_operand.hbm [shape: f32[1,16], index: 4, kind: output, shape index: {}]
  %s5 = sld [smem:[#allocation0]]
  $region30: #{tpu_custom_call.1} parent=0
    _
  %s7 = ssub.s32 1, %s5
  %s8 = scalar_select 0, %s7, %s5
  $region1: #{tpu_custom_call.1} parent=0
    #allocation2 [shape = 'u8[65536]{0}', space=vmem, size = 0x10000, scoped, tag = 'input window, operand 2, single buffered']
    #allocation3 [shape = 's32[1]{0}', space=sflag, size = 0x4, scoped, tag = 'scoped memory for tpu_custom_call.1']
    #allocation4 [shape = 's32[1]{0}', space=sflag, size = 0x4, scoped, tag = 'scoped memory for tpu_custom_call.1']
    #allocation5 [shape = 'u8[512]{0}', space=vmem, size = 0x400, scoped, tag = 'output window, operand 0, single buffered']
    %9 = vsyncpa [#allocation3], 0
    %10 = vsyncpa [#allocation4], 0
    // Predicated region
    $region2: #{tpu_custom_call.1} parent=1 // pred_check
      _
    $region3: #{tpu_custom_call.1} parent=1 // pred_check_branch
      %12 = sbr.rel (0) target = $region5
    $region4: #{tpu_custom_call.1} parent=1 // pred_region
      _
    $region5: #{tpu_custom_call.1} parent=1 // pred_fallthru
      _
    // Predicated region
    $region6: #{tpu_custom_call.1} parent=1 // pred_check
      _
    $region7: #{tpu_custom_call.1} parent=1 // pred_check_branch
      %14 = sbr.rel (0) target = $region9
    $region8: #{tpu_custom_call.1} parent=1 // pred_region
      _
    $region9: #{tpu_custom_call.1} parent=1 // pred_fallthru
      _
    // Predicated region
    $region10: #{tpu_custom_call.1} parent=1 // pred_check
      _
    $region11: #{tpu_custom_call.1} parent=1 // pred_check_branch
      %16 = sbr.rel (0) target = $region13
    $region12: #{tpu_custom_call.1} parent=1 // pred_region
      %s18 = ssub.s32 2048, 2048
      %19 = vsyncadd [#allocation3], %s18
      %s20 = sshll.u32 [#allocation2], 4
      %s21 = int_to_ptr.vmem [resolvable:$true] %s20
      %26 = dma.hbm_to_vmem [thread:$0]  %s2, 2048, %s21, [#allocation3], 128, 128, 8
    $region13: #{tpu_custom_call.1} parent=1 // pred_fallthru
      _
    // Predicated region
    $region14: #{tpu_custom_call.1} parent=1 // pred_check
      _
    $region15: #{tpu_custom_call.1} parent=1 // pred_check_branch
      %28 = sbr.rel (0) target = $region17
    $region16: #{tpu_custom_call.1} parent=1 // pred_region
      _
    $region17: #{tpu_custom_call.1} parent=1 // pred_fallthru
      _
    // Predicated region
    $region18: #{tpu_custom_call.1} parent=1 // pred_check
      _
    $region19: #{tpu_custom_call.1} parent=1 // pred_check_branch
      %30 = sbr.rel (0) target = $region21
    $region20: #{tpu_custom_call.1} parent=1 // pred_region
      %31 = dma.done [#allocation3], 2048
    $region21: #{tpu_custom_call.1} parent=1 // pred_fallthru
      _
    %v32 = vld [vmem:[%s0] sm:$0xff]
    %v33 = vld [vmem:[%s0 + $0x8] sm:$0xff]
    %v34 = vld [vmem:[%s0 + $0x10] sm:$0xff]
    %v35 = vld [vmem:[%s0 + $0x18] sm:$0xff]
    %v36 = vld [vmem:[%s0 + $0x20] sm:$0xff]
    %v37 = vld [vmem:[%s0 + $0x28] sm:$0xff]
    %v38 = vld [vmem:[%s0 + $0x30] sm:$0xff]
    %v39 = vld [vmem:[%s0 + $0x38] sm:$0xff]
    %v40 = vld [vmem:[%s0 + $0x40] sm:$0xff]
    %v41 = vld [vmem:[%s0 + $0x48] sm:$0xff]
    %v42 = vld [vmem:[%s0 + $0x50] sm:$0xff]
    %v43 = vld [vmem:[%s0 + $0x58] sm:$0xff]
    %v44 = vld [vmem:[%s0 + $0x60] sm:$0xff]
    %v45 = vld [vmem:[%s0 + $0x68] sm:$0xff]
    %v46 = vld [vmem:[%s0 + $0x70] sm:$0xff]
    %v47 = vld [vmem:[%s0 + $0x78] sm:$0xff]
    %48 = vxpose.xlu0.b32.start [1/16] %v32, 128
    %49 = vxpose.xlu0.b32.cont [2/16] %v33, 128
    %50 = vxpose.xlu0.b32.cont [3/16] %v34, 128
    %51 = vxpose.xlu0.b32.cont [4/16] %v35, 128
    %52 = vxpose.xlu0.b32.cont [5/16] %v36, 128
    %53 = vxpose.xlu0.b32.cont [6/16] %v37, 128
    %54 = vxpose.xlu0.b32.cont [7/16] %v38, 128
    %55 = vxpose.xlu0.b32.cont [8/16] %v39, 128
    %56 = vxpose.xlu0.b32.cont [9/16] %v40, 128
    %57 = vxpose.xlu0.b32.cont [10/16] %v41, 128
    %58 = vxpose.xlu0.b32.cont [11/16] %v42, 128
    %59 = vxpose.xlu0.b32.cont [12/16] %v43, 128
    %60 = vxpose.xlu0.b32.cont [13/16] %v44, 128
    %61 = vxpose.xlu0.b32.cont [14/16] %v45, 128
    %62 = vxpose.xlu0.b32.cont [15/16] %v46, 128
    %63 = vxpose.xlu0.b32.end [16/16] %v47, 128
    %v64 = vpop.trf.xlu0
    %v65 = vpop.trf.xlu0
    %v66 = vpop.trf.xlu0
    %v67 = vpop.trf.xlu0
    %v68 = vpop.trf.xlu0
    %v69 = vpop.trf.xlu0
    %v70 = vpop.trf.xlu0
    %v71 = vpop.trf.xlu0
    %v72 = vpop.trf.xlu0
    %v73 = vpop.trf.xlu0
    %v74 = vpop.trf.xlu0
    %v75 = vpop.trf.xlu0
    %v76 = vpop.trf.xlu0
    %v77 = vpop.trf.xlu0
    %v78 = vpop.trf.xlu0
    %v79 = vpop.trf.xlu0
    %v80 = vld [vmem:[%s1] sm:$0xff]
    %v81 = vld [vmem:[%s1 + $0x8] sm:$0xff]
    %v82 = vld [vmem:[%s1 + $0x10] sm:$0xff]
    %v83 = vld [vmem:[%s1 + $0x18] sm:$0xff]
    %v84 = vld [vmem:[#allocation2] sm:$0xff]
    %v85 = vld [vmem:[#allocation2 + $0x8] sm:$0xff]
    %v86 = vld [vmem:[#allocation2 + $0x10] sm:$0xff]
    %v87 = vld [vmem:[#allocation2 + $0x18] sm:$0xff]
    %v88 = vadd.f32 %v64, %v65
    %v89 = vadd.f32 %v88, %v66
    %v90 = vadd.f32 %v89, %v67
    %v91 = vrot.slane %v90, 4
    %v92 = vadd.f32 %v90, %v91
    %v93 = vrot.slane %v92, 2
    %v94 = vadd.f32 %v92, %v93
    %v95 = vrot.slane %v94, 1
    %v96 = vadd.f32 %v94, %v95
    %v97 = vmul.f32 %v64, %v64
    %v98 = vmul.f32 %v65, %v65
    %v99 = vmul.f32 %v66, %v66
    %v100 = vmul.f32 %v67, %v67
    %v101 = vadd.f32 %v97, %v98
    %v102 = vadd.f32 %v101, %v99
    %v103 = vadd.f32 %v102, %v100
    %v104 = vrot.slane %v103, 4
    %v105 = vadd.f32 %v103, %v104
    %v106 = vrot.slane %v105, 2
    %v107 = vadd.f32 %v105, %v106
    %v108 = vrot.slane %v107, 1
    %v109 = vadd.f32 %v107, %v108
    %v110 = vmul.f32 %v96, 0.03125
    %v111 = vmul.f32 %v109, 0.03125
    %v112 = vmul.f32 %v110, %v110
    %v113 = vsub.f32 %v111, %v112
    %v114 = vadd.f32 %v113, 1e-05
    %v115 = vrsqrt.pop %v114
    %v116 = vsub.f32 %v64, %v110
    %v117 = vsub.f32 %v65, %v110
    %v118 = vsub.f32 %v66, %v110
    %v119 = vsub.f32 %v67, %v110
    %v120 = vmul.f32 %v116, %v115
    %v121 = vmul.f32 %v117, %v115
    %v122 = vmul.f32 %v118, %v115
    %v123 = vmul.f32 %v119, %v115
    %125 = vset.pattern.permute.xlu0 0
    %126 = vperm.xlu0 %125, %v80
    %v127 = vpop.permute.xlu0 %126
    %130 = vset.pattern.permute.xlu0 0
    %131 = vperm.xlu0 %130, %v81
    %v132 = vpop.permute.xlu0 %131
    %135 = vset.pattern.permute.xlu0 0
    %136 = vperm.xlu0 %135, %v82
    %v137 = vpop.permute.xlu0 %136
    %140 = vset.pattern.permute.xlu0 0
    %141 = vperm.xlu0 %140, %v83
    %v142 = vpop.permute.xlu0 %141
    %v144 = vmul.f32 %v120, %v127
    %v145 = vmul.f32 %v121, %v132
    %v146 = vmul.f32 %v122, %v137
    %v147 = vmul.f32 %v123, %v142
    %148 = vset.pattern.permute.xlu0 4
    %149 = vperm.xlu0 %148, %v80
    %v150 = vpop.permute.xlu0 %149
    %152 = vset.pattern.permute.xlu0 4
    %153 = vperm.xlu0 %152, %v81
    %v154 = vpop.permute.xlu0 %153
    %156 = vset.pattern.permute.xlu0 4
    %157 = vperm.xlu0 %156, %v82
    %v158 = vpop.permute.xlu0 %157
    %160 = vset.pattern.permute.xlu0 4
    %161 = vperm.xlu0 %160, %v83
    %v162 = vpop.permute.xlu0 %161
    %v164 = vadd.f32 %v144, %v150
    %v165 = vadd.f32 %v145, %v154
    %v166 = vadd.f32 %v146, %v158
    %v167 = vadd.f32 %v147, %v162
    %v168 = vmax.f32 %v164, 0.0
    %v169 = vmax.f32 %v165, 0.0
    %v170 = vmax.f32 %v166, 0.0
    %v171 = vmax.f32 %v167, 0.0
    %172 = vset.pattern.permute.xlu0 8
    %173 = vperm.xlu0 %172, %v80
    %v174 = vpop.permute.xlu0 %173
    %176 = vset.pattern.permute.xlu0 8
    %177 = vperm.xlu0 %176, %v81
    %v178 = vpop.permute.xlu0 %177
    %180 = vset.pattern.permute.xlu0 8
    %181 = vperm.xlu0 %180, %v82
    %v182 = vpop.permute.xlu0 %181
    %184 = vset.pattern.permute.xlu0 8
    %185 = vperm.xlu0 %184, %v83
    %v186 = vpop.permute.xlu0 %185
    %vm188 = vcmask 261120
    %v190 = vsel %vm188, %v84, 0
    %v193 = vsel %vm188, %v85, 0
    %v196 = vsel %vm188, %v86, 0
    %v199 = vsel %vm188, %v87, 0
    %201 = vmatprep.subr.mxu0 0.0
    %202 = vmatpush1.msra.mxu0 0.0
    %203 = vmatprep.subr.mxu0 0.0
    %204 = vmatpush1.msra.mxu0 0.0
    %205 = vmatprep.subr.mxu0 0.0
    %206 = vmatpush1.msra.mxu0 0.0
    %207 = vmatprep.subr.mxu0 0.0
    %208 = vmatpush1.msra.mxu0 0.0
    %209 = vmatprep.subr.mxu0 0.0
    %210 = vmatpush1.msra.mxu0 0.0
    %211 = vmatprep.subr.mxu0 0.0
    %212 = vmatpush1.msra.mxu0 0.0
    %213 = vmatprep.subr.mxu0 0.0
    %214 = vmatpush1.msra.mxu0 0.0
    %215 = vmatprep.subr.mxu0 0.0
    %216 = vmatpush1.msra.mxu0 0.0
    %217 = vmatprep.subr.mxu0 0.0
    %218 = vmatpush1.msra.mxu0 0.0
    %219 = vmatprep.subr.mxu0 0.0
    %220 = vmatpush1.msra.mxu0 0.0
    %221 = vmatprep.subr.mxu0 0.0
    %222 = vmatpush1.msra.mxu0 0.0
    %223 = vmatprep.subr.mxu0 0.0
    %224 = vmatpush1.msra.mxu0 0.0
    %225 = vmatprep.subr.mxu0 0.0
    %226 = vmatpush1.msra.mxu0 %v171
    %227 = vmatprep.subr.mxu0 0.0
    %228 = vmatpush1.msra.mxu0 %v170
    %229 = vmatprep.subr.mxu0 0.0
    %230 = vmatpush1.msra.mxu0 %v169
    %231 = vmatprep.subr.mxu0 0.0
    %232 = vmatpush1.msra.mxu0 %v168
    %233 = vmatprep.subr.mxu0 0.0
    %234 = vmatpush2.msra.mxu0 0.0
    %235 = vmatprep.subr.mxu0 0.0
    %236 = vmatpush2.msra.mxu0 0.0
    %237 = vmatprep.subr.mxu0 0.0
    %238 = vmatpush2.msra.mxu0 0.0
    %239 = vmatprep.subr.mxu0 0.0
    %240 = vmatpush2.msra.mxu0 0.0
    %241 = vmatprep.subr.mxu0 0.0
    %242 = vmatpush2.msra.mxu0 0.0
    %243 = vmatprep.subr.mxu0 0.0
    %244 = vmatpush2.msra.mxu0 0.0
    %245 = vmatprep.subr.mxu0 0.0
    %246 = vmatpush2.msra.mxu0 0.0
    %247 = vmatprep.subr.mxu0 0.0
    %248 = vmatpush2.msra.mxu0 0.0
    %249 = vmatprep.subr.mxu0 0.0
    %250 = vmatpush2.msra.mxu0 0.0
    %251 = vmatprep.subr.mxu0 0.0
    %252 = vmatpush2.msra.mxu0 0.0
    %253 = vmatprep.subr.mxu0 0.0
    %254 = vmatpush2.msra.mxu0 0.0
    %255 = vmatprep.subr.mxu0 0.0
    %256 = vmatpush2.msra.mxu0 0.0
    %257 = vmatprep.subr.mxu0 0.0
    %258 = vmatpush2.msra.mxu0 0.0
    %259 = vmatprep.subr.mxu0 0.0
    %260 = vmatpush2.msra.mxu0 0.0
    %261 = vmatprep.subr.mxu0 0.0
    %262 = vmatpush2.msra.mxu0 0.0
    %263 = vmatprep.subr.mxu0 0.0
    %264 = vmatpush2.msra.mxu0 0.0
    %265 = vmatprep.mubr.f32.mxu0 0.0
    %266 = vmatmul.mubr.f32.gmra.mxu0 %v190
    %v267 = vpop.f32.mrf.mxu0
    %v268 = vadd.f32 %v174, %v267
    %v269 = vpop.f32.mrf.mxu0
    %270 = vmatprep.mubr.f32.mxu0 0.0
    %271 = vmatmul.mubr.f32.gmra.mxu0 %v193
    %v272 = vpop.f32.mrf.mxu0
    %v273 = vadd.f32 %v178, %v272
    %v274 = vpop.f32.mrf.mxu0
    %275 = vmatprep.mubr.f32.mxu0 0.0
    %276 = vmatmul.mubr.f32.gmra.mxu0 %v196
    %v277 = vpop.f32.mrf.mxu0
    %v278 = vadd.f32 %v182, %v277
    %v279 = vpop.f32.mrf.mxu0
    %280 = vmatprep.mubr.f32.mxu0 0.0
    %281 = vmatmul.mubr.f32.gmra.mxu0 %v199
    %v282 = vpop.f32.mrf.mxu0
    %v283 = vadd.f32 %v186, %v282
    %v284 = vpop.f32.mrf.mxu0
    %285 = vdwg.mxu0
    %s286 = scalar_lea.vmem [#allocation2], 32
    %v287 = vld [vmem:[%s286] sm:$0xff]
    %v288 = vld [vmem:[%s286 + $0x8] sm:$0xff]
    %v289 = vld [vmem:[%s286 + $0x10] sm:$0xff]
    %v290 = vld [vmem:[%s286 + $0x18] sm:$0xff]
    %v291 = vadd.f32 %v268, %v273
    %v292 = vadd.f32 %v291, %v278
    %v293 = vadd.f32 %v292, %v283
    %v294 = vrot.slane %v293, 4
    %v295 = vadd.f32 %v293, %v294
    %v296 = vrot.slane %v295, 2
    %v297 = vadd.f32 %v295, %v296
    %v298 = vrot.slane %v297, 1
    %v299 = vadd.f32 %v297, %v298
    %v300 = vmul.f32 %v268, %v268
    %v301 = vmul.f32 %v273, %v273
    %v302 = vmul.f32 %v278, %v278
    %v303 = vmul.f32 %v283, %v283
    %v304 = vadd.f32 %v300, %v301
    %v305 = vadd.f32 %v304, %v302
    %v306 = vadd.f32 %v305, %v303
    %v307 = vrot.slane %v306, 4
    %v308 = vadd.f32 %v306, %v307
    %v309 = vrot.slane %v308, 2
    %v310 = vadd.f32 %v308, %v309
    %v311 = vrot.slane %v310, 1
    %v312 = vadd.f32 %v310, %v311
    %v313 = vmul.f32 %v299, 0.03125
    %v314 = vmul.f32 %v312, 0.03125
    %v315 = vmul.f32 %v313, %v313
    %v316 = vsub.f32 %v314, %v315
    %v317 = vadd.f32 %v316, 1e-05
    %v318 = vrsqrt.pop %v317
    %v319 = vsub.f32 %v268, %v313
    %v320 = vsub.f32 %v273, %v313
    %v321 = vsub.f32 %v278, %v313
    %v322 = vsub.f32 %v283, %v313
    %v323 = vmul.f32 %v319, %v318
    %v324 = vmul.f32 %v320, %v318
    %v325 = vmul.f32 %v321, %v318
    %v326 = vmul.f32 %v322, %v318
    %327 = vset.pattern.permute.xlu0 1
    %328 = vperm.xlu0 %327, %v80
    %v329 = vpop.permute.xlu0 %328
    %331 = vset.pattern.permute.xlu0 1
    %332 = vperm.xlu0 %331, %v81
    %v333 = vpop.permute.xlu0 %332
    %335 = vset.pattern.permute.xlu0 1
    %336 = vperm.xlu0 %335, %v82
    %v337 = vpop.permute.xlu0 %336
    %339 = vset.pattern.permute.xlu0 1
    %340 = vperm.xlu0 %339, %v83
    %v341 = vpop.permute.xlu0 %340
    %v343 = vmul.f32 %v323, %v329
    %v344 = vmul.f32 %v324, %v333
    %v345 = vmul.f32 %v325, %v337
    %v346 = vmul.f32 %v326, %v341
    %347 = vset.pattern.permute.xlu0 5
    %348 = vperm.xlu0 %347, %v80
    %v349 = vpop.permute.xlu0 %348
    %351 = vset.pattern.permute.xlu0 5
    %352 = vperm.xlu0 %351, %v81
    %v353 = vpop.permute.xlu0 %352
    %355 = vset.pattern.permute.xlu0 5
    %356 = vperm.xlu0 %355, %v82
    %v357 = vpop.permute.xlu0 %356
    %359 = vset.pattern.permute.xlu0 5
    %360 = vperm.xlu0 %359, %v83
    %v361 = vpop.permute.xlu0 %360
    %v363 = vadd.f32 %v343, %v349
    %v364 = vadd.f32 %v344, %v353
    %v365 = vadd.f32 %v345, %v357
    %v366 = vadd.f32 %v346, %v361
    %v367 = vmax.f32 %v363, 0.0
    %v368 = vmax.f32 %v364, 0.0
    %v369 = vmax.f32 %v365, 0.0
    %v370 = vmax.f32 %v366, 0.0
    %371 = vset.pattern.permute.xlu0 9
    %372 = vperm.xlu0 %371, %v80
    %v373 = vpop.permute.xlu0 %372
    %375 = vset.pattern.permute.xlu0 9
    %376 = vperm.xlu0 %375, %v81
    %v377 = vpop.permute.xlu0 %376
    %379 = vset.pattern.permute.xlu0 9
    %380 = vperm.xlu0 %379, %v82
    %v381 = vpop.permute.xlu0 %380
    %383 = vset.pattern.permute.xlu0 9
    %384 = vperm.xlu0 %383, %v83
    %v385 = vpop.permute.xlu0 %384
    %v388 = vsel %vm188, %v287, 0
    %v391 = vsel %vm188, %v288, 0
    %v394 = vsel %vm188, %v289, 0
    %v397 = vsel %vm188, %v290, 0
    %399 = vmatprep.subr.mxu0 0.0
    %400 = vmatpush1.msra.mxu0 0.0
    %401 = vmatprep.subr.mxu0 0.0
    %402 = vmatpush1.msra.mxu0 0.0
    %403 = vmatprep.subr.mxu0 0.0
    %404 = vmatpush1.msra.mxu0 0.0
    %405 = vmatprep.subr.mxu0 0.0
    %406 = vmatpush1.msra.mxu0 0.0
    %407 = vmatprep.subr.mxu0 0.0
    %408 = vmatpush1.msra.mxu0 0.0
    %409 = vmatprep.subr.mxu0 0.0
    %410 = vmatpush1.msra.mxu0 0.0
    %411 = vmatprep.subr.mxu0 0.0
    %412 = vmatpush1.msra.mxu0 0.0
    %413 = vmatprep.subr.mxu0 0.0
    %414 = vmatpush1.msra.mxu0 0.0
    %415 = vmatprep.subr.mxu0 0.0
    %416 = vmatpush1.msra.mxu0 0.0
    %417 = vmatprep.subr.mxu0 0.0
    %418 = vmatpush1.msra.mxu0 0.0
    %419 = vmatprep.subr.mxu0 0.0
    %420 = vmatpush1.msra.mxu0 0.0
    %421 = vmatprep.subr.mxu0 0.0
    %422 = vmatpush1.msra.mxu0 0.0
    %423 = vmatprep.subr.mxu0 0.0
    %424 = vmatpush1.msra.mxu0 %v370
    %425 = vmatprep.subr.mxu0 0.0
    %426 = vmatpush1.msra.mxu0 %v369
    %427 = vmatprep.subr.mxu0 0.0
    %428 = vmatpush1.msra.mxu0 %v368
    %429 = vmatprep.subr.mxu0 0.0
    %430 = vmatpush1.msra.mxu0 %v367
    %431 = vmatprep.subr.mxu0 0.0
    %432 = vmatpush2.msra.mxu0 0.0
    %433 = vmatprep.subr.mxu0 0.0
    %434 = vmatpush2.msra.mxu0 0.0
    %435 = vmatprep.subr.mxu0 0.0
    %436 = vmatpush2.msra.mxu0 0.0
    %437 = vmatprep.subr.mxu0 0.0
    %438 = vmatpush2.msra.mxu0 0.0
    %439 = vmatprep.subr.mxu0 0.0
    %440 = vmatpush2.msra.mxu0 0.0
    %441 = vmatprep.subr.mxu0 0.0
    %442 = vmatpush2.msra.mxu0 0.0
    %443 = vmatprep.subr.mxu0 0.0
    %444 = vmatpush2.msra.mxu0 0.0
    %445 = vmatprep.subr.mxu0 0.0
    %446 = vmatpush2.msra.mxu0 0.0
    %447 = vmatprep.subr.mxu0 0.0
    %448 = vmatpush2.msra.mxu0 0.0
    %449 = vmatprep.subr.mxu0 0.0
    %450 = vmatpush2.msra.mxu0 0.0
    %451 = vmatprep.subr.mxu0 0.0
    %452 = vmatpush2.msra.mxu0 0.0
    %453 = vmatprep.subr.mxu0 0.0
    %454 = vmatpush2.msra.mxu0 0.0
    %455 = vmatprep.subr.mxu0 0.0
    %456 = vmatpush2.msra.mxu0 0.0
    %457 = vmatprep.subr.mxu0 0.0
    %458 = vmatpush2.msra.mxu0 0.0
    %459 = vmatprep.subr.mxu0 0.0
    %460 = vmatpush2.msra.mxu0 0.0
    %461 = vmatprep.subr.mxu0 0.0
    %462 = vmatpush2.msra.mxu0 0.0
    %463 = vmatprep.mubr.f32.mxu0 0.0
    %464 = vmatmul.mubr.f32.gmra.mxu0 %v388
    %v465 = vpop.f32.mrf.mxu0
    %v466 = vadd.f32 %v373, %v465
    %v467 = vpop.f32.mrf.mxu0
    %468 = vmatprep.mubr.f32.mxu0 0.0
    %469 = vmatmul.mubr.f32.gmra.mxu0 %v391
    %v470 = vpop.f32.mrf.mxu0
    %v471 = vadd.f32 %v377, %v470
    %v472 = vpop.f32.mrf.mxu0
    %473 = vmatprep.mubr.f32.mxu0 0.0
    %474 = vmatmul.mubr.f32.gmra.mxu0 %v394
    %v475 = vpop.f32.mrf.mxu0
    %v476 = vadd.f32 %v381, %v475
    %v477 = vpop.f32.mrf.mxu0
    %478 = vmatprep.mubr.f32.mxu0 0.0
    %479 = vmatmul.mubr.f32.gmra.mxu0 %v397
    %v480 = vpop.f32.mrf.mxu0
    %v481 = vadd.f32 %v385, %v480
    %v482 = vpop.f32.mrf.mxu0
    %483 = vdwg.mxu0
    %v484 = vadd.f32 %v466, %v64
    %v485 = vadd.f32 %v471, %v65
    %v486 = vadd.f32 %v476, %v66
    %v487 = vadd.f32 %v481, %v67
    %s488 = scalar_lea.vmem [#allocation2], 64
    %v489 = vld [vmem:[%s488] sm:$0xff]
    %v490 = vld [vmem:[%s488 + $0x8] sm:$0xff]
    %v491 = vld [vmem:[%s488 + $0x10] sm:$0xff]
    %v492 = vld [vmem:[%s488 + $0x18] sm:$0xff]
    %v493 = vadd.f32 %v484, %v485
    %v494 = vadd.f32 %v493, %v486
    %v495 = vadd.f32 %v494, %v487
    %v496 = vrot.slane %v495, 4
    %v497 = vadd.f32 %v495, %v496
    %v498 = vrot.slane %v497, 2
    %v499 = vadd.f32 %v497, %v498
    %v500 = vrot.slane %v499, 1
    %v501 = vadd.f32 %v499, %v500
    %v502 = vmul.f32 %v484, %v484
    %v503 = vmul.f32 %v485, %v485
    %v504 = vmul.f32 %v486, %v486
    %v505 = vmul.f32 %v487, %v487
    %v506 = vadd.f32 %v502, %v503
    %v507 = vadd.f32 %v506, %v504
    %v508 = vadd.f32 %v507, %v505
    %v509 = vrot.slane %v508, 4
    %v510 = vadd.f32 %v508, %v509
    %v511 = vrot.slane %v510, 2
    %v512 = vadd.f32 %v510, %v511
    %v513 = vrot.slane %v512, 1
    %v514 = vadd.f32 %v512, %v513
    %v515 = vmul.f32 %v501, 0.03125
    %v516 = vmul.f32 %v514, 0.03125
    %v517 = vmul.f32 %v515, %v515
    %v518 = vsub.f32 %v516, %v517
    %v519 = vadd.f32 %v518, 1e-05
    %v520 = vrsqrt.pop %v519
    %v521 = vsub.f32 %v484, %v515
    %v522 = vsub.f32 %v485, %v515
    %v523 = vsub.f32 %v486, %v515
    %v524 = vsub.f32 %v487, %v515
    %v525 = vmul.f32 %v521, %v520
    %v526 = vmul.f32 %v522, %v520
    %v527 = vmul.f32 %v523, %v520
    %v528 = vmul.f32 %v524, %v520
    %529 = vset.pattern.permute.xlu0 2
    %530 = vperm.xlu0 %529, %v80
    %v531 = vpop.permute.xlu0 %530
    %533 = vset.pattern.permute.xlu0 2
    %534 = vperm.xlu0 %533, %v81
    %v535 = vpop.permute.xlu0 %534
    %537 = vset.pattern.permute.xlu0 2
    %538 = vperm.xlu0 %537, %v82
    %v539 = vpop.permute.xlu0 %538
    %541 = vset.pattern.permute.xlu0 2
    %542 = vperm.xlu0 %541, %v83
    %v543 = vpop.permute.xlu0 %542
    %v545 = vmul.f32 %v525, %v531
    %v546 = vmul.f32 %v526, %v535
    %v547 = vmul.f32 %v527, %v539
    %v548 = vmul.f32 %v528, %v543
    %549 = vset.pattern.permute.xlu0 6
    %550 = vperm.xlu0 %549, %v80
    %v551 = vpop.permute.xlu0 %550
    %553 = vset.pattern.permute.xlu0 6
    %554 = vperm.xlu0 %553, %v81
    %v555 = vpop.permute.xlu0 %554
    %557 = vset.pattern.permute.xlu0 6
    %558 = vperm.xlu0 %557, %v82
    %v559 = vpop.permute.xlu0 %558
    %561 = vset.pattern.permute.xlu0 6
    %562 = vperm.xlu0 %561, %v83
    %v563 = vpop.permute.xlu0 %562
    %v565 = vadd.f32 %v545, %v551
    %v566 = vadd.f32 %v546, %v555
    %v567 = vadd.f32 %v547, %v559
    %v568 = vadd.f32 %v548, %v563
    %v569 = vmax.f32 %v565, 0.0
    %v570 = vmax.f32 %v566, 0.0
    %v571 = vmax.f32 %v567, 0.0
    %v572 = vmax.f32 %v568, 0.0
    %573 = vset.pattern.permute.xlu0 10
    %574 = vperm.xlu0 %573, %v80
    %v575 = vpop.permute.xlu0 %574
    %577 = vset.pattern.permute.xlu0 10
    %578 = vperm.xlu0 %577, %v81
    %v579 = vpop.permute.xlu0 %578
    %581 = vset.pattern.permute.xlu0 10
    %582 = vperm.xlu0 %581, %v82
    %v583 = vpop.permute.xlu0 %582
    %585 = vset.pattern.permute.xlu0 10
    %586 = vperm.xlu0 %585, %v83
    %v587 = vpop.permute.xlu0 %586
    %v590 = vsel %vm188, %v489, 0
    %v593 = vsel %vm188, %v490, 0
    %v596 = vsel %vm188, %v491, 0
    %v599 = vsel %vm188, %v492, 0
    %601 = vmatprep.subr.mxu0 0.0
    %602 = vmatpush1.msra.mxu0 0.0
    %603 = vmatprep.subr.mxu0 0.0
    %604 = vmatpush1.msra.mxu0 0.0
    %605 = vmatprep.subr.mxu0 0.0
    %606 = vmatpush1.msra.mxu0 0.0
    %607 = vmatprep.subr.mxu0 0.0
    %608 = vmatpush1.msra.mxu0 0.0
    %609 = vmatprep.subr.mxu0 0.0
    %610 = vmatpush1.msra.mxu0 0.0
    %611 = vmatprep.subr.mxu0 0.0
    %612 = vmatpush1.msra.mxu0 0.0
    %613 = vmatprep.subr.mxu0 0.0
    %614 = vmatpush1.msra.mxu0 0.0
    %615 = vmatprep.subr.mxu0 0.0
    %616 = vmatpush1.msra.mxu0 0.0
    %617 = vmatprep.subr.mxu0 0.0
    %618 = vmatpush1.msra.mxu0 0.0
    %619 = vmatprep.subr.mxu0 0.0
    %620 = vmatpush1.msra.mxu0 0.0
    %621 = vmatprep.subr.mxu0 0.0
    %622 = vmatpush1.msra.mxu0 0.0
    %623 = vmatprep.subr.mxu0 0.0
    %624 = vmatpush1.msra.mxu0 0.0
    %625 = vmatprep.subr.mxu0 0.0
    %626 = vmatpush1.msra.mxu0 %v572
    %627 = vmatprep.subr.mxu0 0.0
    %628 = vmatpush1.msra.mxu0 %v571
    %629 = vmatprep.subr.mxu0 0.0
    %630 = vmatpush1.msra.mxu0 %v570
    %631 = vmatprep.subr.mxu0 0.0
    %632 = vmatpush1.msra.mxu0 %v569
    %633 = vmatprep.subr.mxu0 0.0
    %634 = vmatpush2.msra.mxu0 0.0
    %635 = vmatprep.subr.mxu0 0.0
    %636 = vmatpush2.msra.mxu0 0.0
    %637 = vmatprep.subr.mxu0 0.0
    %638 = vmatpush2.msra.mxu0 0.0
    %639 = vmatprep.subr.mxu0 0.0
    %640 = vmatpush2.msra.mxu0 0.0
    %641 = vmatprep.subr.mxu0 0.0
    %642 = vmatpush2.msra.mxu0 0.0
    %643 = vmatprep.subr.mxu0 0.0
    %644 = vmatpush2.msra.mxu0 0.0
    %645 = vmatprep.subr.mxu0 0.0
    %646 = vmatpush2.msra.mxu0 0.0
    %647 = vmatprep.subr.mxu0 0.0
    %648 = vmatpush2.msra.mxu0 0.0
    %649 = vmatprep.subr.mxu0 0.0
    %650 = vmatpush2.msra.mxu0 0.0
    %651 = vmatprep.subr.mxu0 0.0
    %652 = vmatpush2.msra.mxu0 0.0
    %653 = vmatprep.subr.mxu0 0.0
    %654 = vmatpush2.msra.mxu0 0.0
    %655 = vmatprep.subr.mxu0 0.0
    %656 = vmatpush2.msra.mxu0 0.0
    %657 = vmatprep.subr.mxu0 0.0
    %658 = vmatpush2.msra.mxu0 0.0
    %659 = vmatprep.subr.mxu0 0.0
    %660 = vmatpush2.msra.mxu0 0.0
    %661 = vmatprep.subr.mxu0 0.0
    %662 = vmatpush2.msra.mxu0 0.0
    %663 = vmatprep.subr.mxu0 0.0
    %664 = vmatpush2.msra.mxu0 0.0
    %665 = vmatprep.mubr.f32.mxu0 0.0
    %666 = vmatmul.mubr.f32.gmra.mxu0 %v590
    %v667 = vpop.f32.mrf.mxu0
    %v668 = vadd.f32 %v575, %v667
    %v669 = vpop.f32.mrf.mxu0
    %670 = vmatprep.mubr.f32.mxu0 0.0
    %671 = vmatmul.mubr.f32.gmra.mxu0 %v593
    %v672 = vpop.f32.mrf.mxu0
    %v673 = vadd.f32 %v579, %v672
    %v674 = vpop.f32.mrf.mxu0
    %675 = vmatprep.mubr.f32.mxu0 0.0
    %676 = vmatmul.mubr.f32.gmra.mxu0 %v596
    %v677 = vpop.f32.mrf.mxu0
    %v678 = vadd.f32 %v583, %v677
    %v679 = vpop.f32.mrf.mxu0
    %680 = vmatprep.mubr.f32.mxu0 0.0
    %681 = vmatmul.mubr.f32.gmra.mxu0 %v599
    %v682 = vpop.f32.mrf.mxu0
    %v683 = vadd.f32 %v587, %v682
    %v684 = vpop.f32.mrf.mxu0
    %685 = vdwg.mxu0
    %s686 = scalar_lea.vmem [#allocation2], 96
    %v687 = vld [vmem:[%s686] sm:$0xff]
    %v688 = vld [vmem:[%s686 + $0x8] sm:$0xff]
    %v689 = vld [vmem:[%s686 + $0x10] sm:$0xff]
    %v690 = vld [vmem:[%s686 + $0x18] sm:$0xff]
    %v691 = vadd.f32 %v668, %v673
    %v692 = vadd.f32 %v691, %v678
    %v693 = vadd.f32 %v692, %v683
    %v694 = vrot.slane %v693, 4
    %v695 = vadd.f32 %v693, %v694
    %v696 = vrot.slane %v695, 2
    %v697 = vadd.f32 %v695, %v696
    %v698 = vrot.slane %v697, 1
    %v699 = vadd.f32 %v697, %v698
    %v700 = vmul.f32 %v668, %v668
    %v701 = vmul.f32 %v673, %v673
    %v702 = vmul.f32 %v678, %v678
    %v703 = vmul.f32 %v683, %v683
    %v704 = vadd.f32 %v700, %v701
    %v705 = vadd.f32 %v704, %v702
    %v706 = vadd.f32 %v705, %v703
    %v707 = vrot.slane %v706, 4
    %v708 = vadd.f32 %v706, %v707
    %v709 = vrot.slane %v708, 2
    %v710 = vadd.f32 %v708, %v709
    %v711 = vrot.slane %v710, 1
    %v712 = vadd.f32 %v710, %v711
    %v713 = vmul.f32 %v699, 0.03125
    %v714 = vmul.f32 %v712, 0.03125
    %v715 = vmul.f32 %v713, %v713
    %v716 = vsub.f32 %v714, %v715
    %v717 = vadd.f32 %v716, 1e-05
    %v718 = vrsqrt.pop %v717
    %v719 = vsub.f32 %v668, %v713
    %v720 = vsub.f32 %v673, %v713
    %v721 = vsub.f32 %v678, %v713
    %v722 = vsub.f32 %v683, %v713
    %v723 = vmul.f32 %v719, %v718
    %v724 = vmul.f32 %v720, %v718
    %v725 = vmul.f32 %v721, %v718
    %v726 = vmul.f32 %v722, %v718
    %727 = vset.pattern.permute.xlu0 3
    %728 = vperm.xlu0 %727, %v80
    %v729 = vpop.permute.xlu0 %728
    %731 = vset.pattern.permute.xlu0 3
    %732 = vperm.xlu0 %731, %v81
    %v733 = vpop.permute.xlu0 %732
    %735 = vset.pattern.permute.xlu0 3
    %736 = vperm.xlu0 %735, %v82
    %v737 = vpop.permute.xlu0 %736
    %739 = vset.pattern.permute.xlu0 3
    %740 = vperm.xlu0 %739, %v83
    %v741 = vpop.permute.xlu0 %740
    %v743 = vmul.f32 %v723, %v729
    %v744 = vmul.f32 %v724, %v733
    %v745 = vmul.f32 %v725, %v737
    %v746 = vmul.f32 %v726, %v741
    %747 = vset.pattern.permute.xlu0 7
    %748 = vperm.xlu0 %747, %v80
    %v749 = vpop.permute.xlu0 %748
    %751 = vset.pattern.permute.xlu0 7
    %752 = vperm.xlu0 %751, %v81
    %v753 = vpop.permute.xlu0 %752
    %755 = vset.pattern.permute.xlu0 7
    %756 = vperm.xlu0 %755, %v82
    %v757 = vpop.permute.xlu0 %756
    %759 = vset.pattern.permute.xlu0 7
    %760 = vperm.xlu0 %759, %v83
    %v761 = vpop.permute.xlu0 %760
    %v763 = vadd.f32 %v743, %v749
    %v764 = vadd.f32 %v744, %v753
    %v765 = vadd.f32 %v745, %v757
    %v766 = vadd.f32 %v746, %v761
    %v767 = vmax.f32 %v763, 0.0
    %v768 = vmax.f32 %v764, 0.0
    %v769 = vmax.f32 %v765, 0.0
    %v770 = vmax.f32 %v766, 0.0
    %771 = vset.pattern.permute.xlu0 11
    %772 = vperm.xlu0 %771, %v80
    %v773 = vpop.permute.xlu0 %772
    %775 = vset.pattern.permute.xlu0 11
    %776 = vperm.xlu0 %775, %v81
    %v777 = vpop.permute.xlu0 %776
    %779 = vset.pattern.permute.xlu0 11
    %780 = vperm.xlu0 %779, %v82
    %v781 = vpop.permute.xlu0 %780
    %783 = vset.pattern.permute.xlu0 11
    %784 = vperm.xlu0 %783, %v83
    %v785 = vpop.permute.xlu0 %784
    %v788 = vsel %vm188, %v687, 0
    %v791 = vsel %vm188, %v688, 0
    %v794 = vsel %vm188, %v689, 0
    %v797 = vsel %vm188, %v690, 0
    %799 = vmatprep.subr.mxu0 0.0
    %800 = vmatpush1.msra.mxu0 0.0
    %801 = vmatprep.subr.mxu0 0.0
    %802 = vmatpush1.msra.mxu0 0.0
    %803 = vmatprep.subr.mxu0 0.0
    %804 = vmatpush1.msra.mxu0 0.0
    %805 = vmatprep.subr.mxu0 0.0
    %806 = vmatpush1.msra.mxu0 0.0
    %807 = vmatprep.subr.mxu0 0.0
    %808 = vmatpush1.msra.mxu0 0.0
    %809 = vmatprep.subr.mxu0 0.0
    %810 = vmatpush1.msra.mxu0 0.0
    %811 = vmatprep.subr.mxu0 0.0
    %812 = vmatpush1.msra.mxu0 0.0
    %813 = vmatprep.subr.mxu0 0.0
    %814 = vmatpush1.msra.mxu0 0.0
    %815 = vmatprep.subr.mxu0 0.0
    %816 = vmatpush1.msra.mxu0 0.0
    %817 = vmatprep.subr.mxu0 0.0
    %818 = vmatpush1.msra.mxu0 0.0
    %819 = vmatprep.subr.mxu0 0.0
    %820 = vmatpush1.msra.mxu0 0.0
    %821 = vmatprep.subr.mxu0 0.0
    %822 = vmatpush1.msra.mxu0 0.0
    %823 = vmatprep.subr.mxu0 0.0
    %824 = vmatpush1.msra.mxu0 %v770
    %825 = vmatprep.subr.mxu0 0.0
    %826 = vmatpush1.msra.mxu0 %v769
    %827 = vmatprep.subr.mxu0 0.0
    %828 = vmatpush1.msra.mxu0 %v768
    %829 = vmatprep.subr.mxu0 0.0
    %830 = vmatpush1.msra.mxu0 %v767
    %831 = vmatprep.subr.mxu0 0.0
    %832 = vmatpush2.msra.mxu0 0.0
    %833 = vmatprep.subr.mxu0 0.0
    %834 = vmatpush2.msra.mxu0 0.0
    %835 = vmatprep.subr.mxu0 0.0
    %836 = vmatpush2.msra.mxu0 0.0
    %837 = vmatprep.subr.mxu0 0.0
    %838 = vmatpush2.msra.mxu0 0.0
    %839 = vmatprep.subr.mxu0 0.0
    %840 = vmatpush2.msra.mxu0 0.0
    %841 = vmatprep.subr.mxu0 0.0
    %842 = vmatpush2.msra.mxu0 0.0
    %843 = vmatprep.subr.mxu0 0.0
    %844 = vmatpush2.msra.mxu0 0.0
    %845 = vmatprep.subr.mxu0 0.0
    %846 = vmatpush2.msra.mxu0 0.0
    %847 = vmatprep.subr.mxu0 0.0
    %848 = vmatpush2.msra.mxu0 0.0
    %849 = vmatprep.subr.mxu0 0.0
    %850 = vmatpush2.msra.mxu0 0.0
    %851 = vmatprep.subr.mxu0 0.0
    %852 = vmatpush2.msra.mxu0 0.0
    %853 = vmatprep.subr.mxu0 0.0
    %854 = vmatpush2.msra.mxu0 0.0
    %855 = vmatprep.subr.mxu0 0.0
    %856 = vmatpush2.msra.mxu0 0.0
    %857 = vmatprep.subr.mxu0 0.0
    %858 = vmatpush2.msra.mxu0 0.0
    %859 = vmatprep.subr.mxu0 0.0
    %860 = vmatpush2.msra.mxu0 0.0
    %861 = vmatprep.subr.mxu0 0.0
    %862 = vmatpush2.msra.mxu0 0.0
    %863 = vmatprep.mubr.f32.mxu0 0.0
    %864 = vmatmul.mubr.f32.gmra.mxu0 %v788
    %v865 = vpop.f32.mrf.mxu0
    %v866 = vadd.f32 %v773, %v865
    %v867 = vpop.f32.mrf.mxu0
    %868 = vmatprep.mubr.f32.mxu0 0.0
    %869 = vmatmul.mubr.f32.gmra.mxu0 %v791
    %v870 = vpop.f32.mrf.mxu0
    %v871 = vadd.f32 %v777, %v870
    %v872 = vpop.f32.mrf.mxu0
    %873 = vmatprep.mubr.f32.mxu0 0.0
    %874 = vmatmul.mubr.f32.gmra.mxu0 %v794
    %v875 = vpop.f32.mrf.mxu0
    %v876 = vadd.f32 %v781, %v875
    %v877 = vpop.f32.mrf.mxu0
    %878 = vmatprep.mubr.f32.mxu0 0.0
    %879 = vmatmul.mubr.f32.gmra.mxu0 %v797
    %v880 = vpop.f32.mrf.mxu0
    %v881 = vadd.f32 %v785, %v880
    %v882 = vpop.f32.mrf.mxu0
    %883 = vdwg.mxu0
    %v884 = vadd.f32 %v866, %v484
    %v885 = vadd.f32 %v871, %v485
    %v886 = vadd.f32 %v876, %v486
    %v887 = vadd.f32 %v881, %v487
    %v888 = vld [vmem:[%s1] sm:$0x1]
    %v889 = vadd.f32 %v884, %v885
    %v890 = vadd.f32 %v889, %v886
    %v891 = vadd.f32 %v890, %v887
    %v892 = vrot.slane %v891, 4
    %v893 = vadd.f32 %v891, %v892
    %v894 = vrot.slane %v893, 2
    %v895 = vadd.f32 %v893, %v894
    %v896 = vrot.slane %v895, 1
    %v897 = vadd.f32 %v895, %v896
    %v898 = vmul.f32 %v884, %v884
    %v899 = vmul.f32 %v885, %v885
    %v900 = vmul.f32 %v886, %v886
    %v901 = vmul.f32 %v887, %v887
    %v902 = vadd.f32 %v898, %v899
    %v903 = vadd.f32 %v902, %v900
    %v904 = vadd.f32 %v903, %v901
    %v905 = vrot.slane %v904, 4
    %v906 = vadd.f32 %v904, %v905
    %v907 = vrot.slane %v906, 2
    %v908 = vadd.f32 %v906, %v907
    %v909 = vrot.slane %v908, 1
    %v910 = vadd.f32 %v908, %v909
    %v911 = vmul.f32 %v897, 0.03125
    %v912 = vmul.f32 %v910, 0.03125
    %v913 = vmul.f32 %v911, %v911
    %v914 = vsub.f32 %v912, %v913
    %v915 = vadd.f32 %v914, 1e-05
    %v916 = vrsqrt.pop %v915
    %v917 = vsub.f32 %v884, %v911
    %v918 = vsub.f32 %v885, %v911
    %v919 = vsub.f32 %v886, %v911
    %v920 = vsub.f32 %v887, %v911
    %v921 = vmul.f32 %v917, %v916
    %v922 = vmul.f32 %v918, %v916
    %v923 = vmul.f32 %v919, %v916
    %v924 = vmul.f32 %v920, %v916
    %925 = vset.pattern.permute.xlu0 12
    %926 = vperm.xlu0 %925, %v80
    %v927 = vpop.permute.xlu0 %926
    %929 = vset.pattern.permute.xlu0 12
    %930 = vperm.xlu0 %929, %v81
    %v931 = vpop.permute.xlu0 %930
    %933 = vset.pattern.permute.xlu0 12
    %934 = vperm.xlu0 %933, %v82
    %v935 = vpop.permute.xlu0 %934
    %937 = vset.pattern.permute.xlu0 12
    %938 = vperm.xlu0 %937, %v83
    %v939 = vpop.permute.xlu0 %938
    %v941 = vmul.f32 %v921, %v927
    %v942 = vmul.f32 %v922, %v931
    %v943 = vmul.f32 %v923, %v935
    %v944 = vmul.f32 %v924, %v939
    %945 = vset.pattern.permute.xlu0 13
    %946 = vperm.xlu0 %945, %v80
    %v947 = vpop.permute.xlu0 %946
    %949 = vset.pattern.permute.xlu0 13
    %950 = vperm.xlu0 %949, %v81
    %v951 = vpop.permute.xlu0 %950
    %953 = vset.pattern.permute.xlu0 13
    %954 = vperm.xlu0 %953, %v82
    %v955 = vpop.permute.xlu0 %954
    %957 = vset.pattern.permute.xlu0 13
    %958 = vperm.xlu0 %957, %v83
    %v959 = vpop.permute.xlu0 %958
    %v961 = vadd.f32 %v941, %v947
    %v962 = vadd.f32 %v942, %v951
    %v963 = vadd.f32 %v943, %v955
    %v964 = vadd.f32 %v944, %v959
    %v965 = vmax.f32 %v961, 0.0
    %v966 = vmax.f32 %v962, 0.0
    %v967 = vmax.f32 %v963, 0.0
    %v968 = vmax.f32 %v964, 0.0
    %v969 = vld [vmem:[%s3] sm:$0x1]
    %971 = vset.pattern.permute.xlu0 14
    %972 = vperm.xlu0 %971, %v888
    %v973 = vpop.permute.xlu0 %972
    %v976 = vsel %vm188, %v969, 0
    %978 = vmatprep.subr.mxu0 0.0
    %979 = vmatpush1.msra.mxu0 0.0
    %980 = vmatprep.subr.mxu0 0.0
    %981 = vmatpush1.msra.mxu0 0.0
    %982 = vmatprep.subr.mxu0 0.0
    %983 = vmatpush1.msra.mxu0 0.0
    %984 = vmatprep.subr.mxu0 0.0
    %985 = vmatpush1.msra.mxu0 0.0
    %986 = vmatprep.subr.mxu0 0.0
    %987 = vmatpush1.msra.mxu0 0.0
    %988 = vmatprep.subr.mxu0 0.0
    %989 = vmatpush1.msra.mxu0 0.0
    %990 = vmatprep.subr.mxu0 0.0
    %991 = vmatpush1.msra.mxu0 0.0
    %992 = vmatprep.subr.mxu0 0.0
    %993 = vmatpush1.msra.mxu0 0.0
    %994 = vmatprep.subr.mxu0 0.0
    %995 = vmatpush1.msra.mxu0 0.0
    %996 = vmatprep.subr.mxu0 0.0
    %997 = vmatpush1.msra.mxu0 0.0
    %998 = vmatprep.subr.mxu0 0.0
    %999 = vmatpush1.msra.mxu0 0.0
    %1000 = vmatprep.subr.mxu0 0.0
    %1001 = vmatpush1.msra.mxu0 0.0
    %1002 = vmatprep.subr.mxu0 0.0
    %1003 = vmatpush1.msra.mxu0 %v968
    %1004 = vmatprep.subr.mxu0 0.0
    %1005 = vmatpush1.msra.mxu0 %v967
    %1006 = vmatprep.subr.mxu0 0.0
    %1007 = vmatpush1.msra.mxu0 %v966
    %1008 = vmatprep.subr.mxu0 0.0
    %1009 = vmatpush1.msra.mxu0 %v965
    %1010 = vmatprep.subr.mxu0 0.0
    %1011 = vmatpush2.msra.mxu0 0.0
    %1012 = vmatprep.subr.mxu0 0.0
    %1013 = vmatpush2.msra.mxu0 0.0
    %1014 = vmatprep.subr.mxu0 0.0
    %1015 = vmatpush2.msra.mxu0 0.0
    %1016 = vmatprep.subr.mxu0 0.0
    %1017 = vmatpush2.msra.mxu0 0.0
    %1018 = vmatprep.subr.mxu0 0.0
    %1019 = vmatpush2.msra.mxu0 0.0
    %1020 = vmatprep.subr.mxu0 0.0
    %1021 = vmatpush2.msra.mxu0 0.0
    %1022 = vmatprep.subr.mxu0 0.0
    %1023 = vmatpush2.msra.mxu0 0.0
    %1024 = vmatprep.subr.mxu0 0.0
    %1025 = vmatpush2.msra.mxu0 0.0
    %1026 = vmatprep.subr.mxu0 0.0
    %1027 = vmatpush2.msra.mxu0 0.0
    %1028 = vmatprep.subr.mxu0 0.0
    %1029 = vmatpush2.msra.mxu0 0.0
    %1030 = vmatprep.subr.mxu0 0.0
    %1031 = vmatpush2.msra.mxu0 0.0
    %1032 = vmatprep.subr.mxu0 0.0
    %1033 = vmatpush2.msra.mxu0 0.0
    %1034 = vmatprep.subr.mxu0 0.0
    %1035 = vmatpush2.msra.mxu0 0.0
    %1036 = vmatprep.subr.mxu0 0.0
    %1037 = vmatpush2.msra.mxu0 0.0
    %1038 = vmatprep.subr.mxu0 0.0
    %1039 = vmatpush2.msra.mxu0 0.0
    %1040 = vmatprep.subr.mxu0 0.0
    %1041 = vmatpush2.msra.mxu0 0.0
    %1042 = vmatprep.mubr.f32.mxu0 0.0
    %1043 = vmatmul.mubr.f32.gmra.mxu0 %v976
    %v1044 = vpop.f32.mrf.mxu0
    %v1045 = vadd.f32 %v973, %v1044
    %v1046 = vpop.f32.mrf.mxu0
    %1047 = vdwg.mxu0
    %1048 = vst [vmem:[#allocation5] sm:$0x1] %v1045
    // Predicated region
    $region22: #{tpu_custom_call.1} parent=1 // pred_check
      _
    $region23: #{tpu_custom_call.1} parent=1 // pred_check_branch
      %1050 = sbr.rel (0) target = $region25
    $region24: #{tpu_custom_call.1} parent=1 // pred_region
      %s1052 = ssub.s32 16, 16
      %1053 = vsyncadd [#allocation4], %s1052
      %s1055 = sshll.u32 [#allocation5], 4
      %s1056 = int_to_ptr.vmem [resolvable:$true] %s1055
      %1058 = dma.vmem_to_hbm [thread:$0]  %s1056, 16, %s4, [#allocation4]
    $region25: #{tpu_custom_call.1} parent=1 // pred_fallthru
      _
    // Predicated region
    $region26: #{tpu_custom_call.1} parent=1 // pred_check
      _
    $region27: #{tpu_custom_call.1} parent=1 // pred_check_branch
      %1060 = sbr.rel (0) target = $region29
    $region28: #{tpu_custom_call.1} parent=1 // pred_region
      %1061 = dma.done [#allocation4], 16
    $region29: #{tpu_custom_call.1} parent=1 // pred_fallthru
      _
    %1062 = vsyncpa [#allocation3], 1
    %1063 = vsyncpa [#allocation4], 1

</llo_original>
